<compile_context>
chip_gen: v7x
topology: tpu7x:2x2x1
jax: 0.10.0
libtpu: 0.0.40
codegen_flags: <defaults>
</compile_context>

<pallas_src>
import jax
import jax.numpy as jnp
import numpy as np
from jax.experimental import pallas as pl
from jax.experimental.pallas import tpu as pltpu


def _matmul_bias_tanh_kernel(x_ref, w_ref, b_ref, o_ref):
    # x_ref: (1, K, M) bf16   im2col slab for one batch element
    # w_ref: (Cout, K) bf16   reshaped conv weights (resident in VMEM)
    # b_ref: (Cout, 1) f32
    # o_ref: (1, Cout, M)     lane-dense output (M on the lane axis)
    acc = jax.lax.dot_general(
        w_ref[...], x_ref[0, :, :],
        (((1,), (0,)), ((), ())),
        preferred_element_type=jnp.float32)        # (Cout, M), f32 accumulate
    acc = acc + b_ref[...]                          # bias broadcast along lanes
    o_ref[0, :, :] = jnp.tanh(acc).astype(o_ref.dtype)


def nonorm_conv2d_tanh(x_nchw, weight_oihw, bias, *, stride, padding):
    """Conv2d(stride, padding) + Tanh. x_nchw: (N, Cin, H, W) -> (N, Cout, H_out, W_out)."""
    N, Cin, H, W = x_nchw.shape
    Cout, Cin_w, KH, KW = weight_oihw.shape
    assert Cin == Cin_w

    H_out = (H + 2 * padding - KH) // stride + 1
    W_out = (W + 2 * padding - KW) // stride + 1
    M = H_out * W_out
    K = KH * KW * Cin

    # ---- Glue (XLA): pad + im2col in bf16, k index = (kh*KW + kw)*Cin + ci ----
    x_pad = jnp.pad(x_nchw.astype(jnp.bfloat16),
                    ((0, 0), (0, 0), (padding, padding), (padding, padding)))
    cols = []
    for kh in range(KH):
        for kw in range(KW):
            cols.append(x_pad[:, :,
                              kh:kh + (H_out - 1) * stride + 1:stride,
                              kw:kw + (W_out - 1) * stride + 1:stride])
    x_col = jnp.concatenate(cols, axis=1).reshape(N, K, M)            # (N, K, M) bf16

    # Weights -> (Cout, K) with matching k ordering; bias -> (Cout, 1) f32.
    w2 = jnp.transpose(weight_oihw, (0, 2, 3, 1)).reshape(Cout, K).astype(jnp.bfloat16)
    b2 = bias.reshape(Cout, 1).astype(jnp.float32)

    out = pl.pallas_call(
        _matmul_bias_tanh_kernel,
        out_shape=jax.ShapeDtypeStruct((N, Cout, M), x_nchw.dtype),
        grid=(N,),
        in_specs=[
            pl.BlockSpec((1, K, M), lambda n: (n, 0, 0)),
            pl.BlockSpec((Cout, K), lambda n: (0, 0)),     # resident weights
            pl.BlockSpec((Cout, 1), lambda n: (0, 0)),     # resident bias
        ],
        out_specs=pl.BlockSpec((1, Cout, M), lambda n: (n, 0, 0)),
        compiler_params=pltpu.CompilerParams(dimension_semantics=("parallel",)),
    )(x_col, w2, b2)

    # (N, Cout, M) is already channel-major: reshape straight to NCHW.
    return out.reshape(N, Cout, H_out, W_out)


if __name__ == "__main__":
    def _run_check(cin, cout, ksz, stride, padding, N, H, W):
        key = jax.random.PRNGKey(0)
        kx, kw_, kb = jax.random.split(key, 3)
        x = jax.random.normal(kx, (N, cin, H, W), dtype=jnp.float32)
        # nn.Conv2d default init ~ uniform(-1/sqrt(fan_in), 1/sqrt(fan_in))
        fan_in = cin * ksz * ksz
        bound = 1.0 / np.sqrt(fan_in)
        weight = jax.random.uniform(kw_, (cout, cin, ksz, ksz),
                                    minval=-bound, maxval=bound, dtype=jnp.float32)
        bias = jax.random.uniform(kb, (cout,), minval=-bound, maxval=bound,
                                  dtype=jnp.float32)

        out = nonorm_conv2d_tanh(x, weight, bias, stride=stride, padding=padding)
        out = jax.block_until_ready(out)

        # Reference: XLA conv on the same bf16-quantized operands with f32
        # accumulation (kernel uses bf16 MXU operands), then bias + tanh.
        ref = jax.lax.conv_general_dilated(
            x.astype(jnp.bfloat16), weight.astype(jnp.bfloat16),
            window_strides=(stride, stride),
            padding=((padding, padding), (padding, padding)),
            dimension_numbers=("NCHW", "OIHW", "NCHW"),
            preferred_element_type=jnp.float32)
        ref = jnp.tanh(ref + bias[None, :, None, None])
        np.testing.assert_allclose(np.asarray(out), np.asarray(ref),
                                   atol=5e-3, rtol=5e-3)

    # Main config: N=2, Cin=4, Cout=8, 16x16, k=3, stride=1, pad=1 (M = 256, lane-dense).
    _run_check(cin=4, cout=8, ksz=3, stride=1, padding=1, N=2, H=16, W=16)
    # stride > 1 path (flagged as untested in the review).
    _run_check(cin=4, cout=8, ksz=3, stride=2, padding=1, N=2, H=16, W=16)

    print("KERNEL_OK")
</pallas_src>

<mosaic_0001>
module attributes {stable_mosaic.version = 11 : i64} {
  func.func @_matmul_bias_tanh_kernel(%arg0: i32, %arg1: memref<1x36x256xbf16, #tpu.memory_space<vmem>>, %arg2: memref<8x36xbf16, #tpu.memory_space<vmem>>, %arg3: memref<8x1xf32, #tpu.memory_space<vmem>>, %arg4: memref<1x8x256xf32, #tpu.memory_space<vmem>>) attributes {dimension_semantics = [#tpu.dimension_semantics<parallel>], iteration_bounds = array<i64: 2>, scalar_prefetch = 0 : i64, scratch_operands = 0 : i64, tpu.core_type = #tpu.core_type<tc>, window_params = [{transform_indices = @transform_0, window_bounds = array<i64: 1, 36, 256>}, {pipeline_mode = #tpu.pipeline_mode<synchronous>, transform_indices = @transform_1, window_bounds = array<i64: 8, 36>}, {pipeline_mode = #tpu.pipeline_mode<synchronous>, transform_indices = @transform_2, window_bounds = array<i64: 8, 1>}, {transform_indices = @transform_3, window_bounds = array<i64: 1, 8, 256>}]} {
    %c0 = arith.constant 0 : index
    %c0_0 = arith.constant 0 : index
    %0 = vector.load %arg2[%c0, %c0_0] : memref<8x36xbf16, #tpu.memory_space<vmem>>, vector<8x36xbf16>
    %c0_1 = arith.constant 0 : index
    %c0_2 = arith.constant 0 : index
    %c0_3 = arith.constant 0 : index
    %1 = vector.load %arg1[%c0_1, %c0_2, %c0_3] : memref<1x36x256xbf16, #tpu.memory_space<vmem>>, vector<1x36x256xbf16>
    %2 = vector.shape_cast %1 : vector<1x36x256xbf16> to vector<36x256xbf16>
    %cst = arith.constant dense<0.000000e+00> : vector<8x256xf32>
    %3 = tpu.matmul %0, %2, %cst {dimension_numbers = #tpu.dot_dimension_numbers<[1], [0], [0], [1], [0, 0, 1, 1], [], []>} : vector<8x36xbf16>, vector<36x256xbf16>, vector<8x256xf32> -> vector<8x256xf32>
    %c0_4 = arith.constant 0 : index
    %c0_5 = arith.constant 0 : index
    %4 = vector.load %arg3[%c0_4, %c0_5] : memref<8x1xf32, #tpu.memory_space<vmem>>, vector<8x1xf32>
    %5 = vector.broadcast %4 : vector<8x1xf32> to vector<8x256xf32>
    %6 = arith.addf %3, %5 : vector<8x256xf32>
    %7 = math.tanh %6 : vector<8x256xf32>
    %c0_6 = arith.constant 0 : index
    %c0_7 = arith.constant 0 : index
    %c0_8 = arith.constant 0 : index
    %8 = vector.load %arg4[%c0_6, %c0_7, %c0_8] : memref<1x8x256xf32, #tpu.memory_space<vmem>>, vector<1x8x256xf32>
    %9 = vector.shape_cast %8 : vector<1x8x256xf32> to vector<8x256xf32>
    %10 = vector.shape_cast %7 : vector<8x256xf32> to vector<1x8x256xf32>
    tpu.vector_store %arg4[%c0_6, %c0_7, %c0_8], %10 {strides = array<i32>} : memref<1x8x256xf32, #tpu.memory_space<vmem>>, vector<1x8x256xf32>,
    return
  }
  func.func @transform_0(%arg0: i32) -> (i32, i32, i32) {
    %c0_i32 = arith.constant 0 : i32
    %c0_i32_0 = arith.constant 0 : i32
    %c0_i32_1 = arith.constant 0 : i32
    return %arg0, %c0_i32, %c0_i32_0 : i32, i32, i32
  }
  func.func @transform_1(%arg0: i32) -> (i32, i32) {
    %c0_i32 = arith.constant 0 : i32
    %c0_i32_0 = arith.constant 0 : i32
    %c0_i32_1 = arith.constant 0 : i32
    return %c0_i32, %c0_i32_0 : i32, i32
  }
  func.func @transform_2(%arg0: i32) -> (i32, i32) {
    %c0_i32 = arith.constant 0 : i32
    %c0_i32_0 = arith.constant 0 : i32
    %c0_i32_1 = arith.constant 0 : i32
    return %c0_i32, %c0_i32_0 : i32, i32
  }
  func.func @transform_3(%arg0: i32) -> (i32, i32, i32) {
    %c0_i32 = arith.constant 0 : i32
    %c0_i32_0 = arith.constant 0 : i32
    %c0_i32_1 = arith.constant 0 : i32
    return %arg0, %c0_i32, %c0_i32_0 : i32, i32, i32
  }
}

</mosaic_0001>

<llo_original>
// kernel: tpu_custom_call.1
$region0: #{tpu_custom_call.1}
  #allocation0 [shape = 'u32[]', space=smem, size = 0x4, offset = 0x4, fixed_abs, tag = 'smem constant byte address 0x4 - core index']
  #allocation1 [shape = 'u32[144,128]{1,0:T(1,128)}', space=vmem, size = 0x12000, scoped, tag = 'internal scratch']
  %s0 = inlined_call_operand.vmem [shape: bf16[2,36,256], index: 0, kind: input, shape index: {}]
  %s1 = inlined_call_operand.vmem [shape: bf16[8,36], index: 1, kind: input, shape index: {}]
  %s2 = inlined_call_operand.vmem [shape: f32[8,1], index: 2, kind: input, shape index: {}]
  %s3 = inlined_call_operand.hbm [shape: f32[2,8,256], index: 3, kind: output, shape index: {}]
  %s4 = sld [smem:[#allocation0]]
  $region45: #{tpu_custom_call.1} parent=0
    _
  %s6 = ssub.s32 1, %s4
  %s7 = scalar_select 0, %s6, %s4
  $region1: #{tpu_custom_call.1} parent=0
    #allocation2 [shape = 'u8[16384]{0}', space=vmem, size = 0x4000, scoped, tag = 'output window, operand 0']
    #allocation3 [shape = 's32[2]{0}', space=sflag, size = 0x8, scoped, tag = 'scoped memory for tpu_custom_call.1']
    %8 = vsyncpa [#allocation3], 0
    %s9 = scalar_lea.sflag [#allocation3], 1
    %10 = vsyncpa %s9, 0
    loop: start=0, step=1, limit=4
    $region2: #{tpu_custom_call.1} parent=1 // loop_pre_header
      _
    $region3: #{tpu_custom_call.1} parent=1 // loop_header
      %s12 = sphi 0, %s16
      %p13 = scmp.ge.s32.totalorder %s12, 4
      %s22 = sphi 0, %s24
      %s25 = sphi 0, %s22
      %s26 = sphi 0, %s25
      %s42 = sphi 0, %s26
      %s46 = sphi 0, %s46
      %s48 = sphi 0, %s46
      %s49 = sphi 0, %s48
      %s63 = sphi 0, %s49
      %s67 = sphi 0, %s67
      %s69 = sphi 0, %s67
      %s70 = sphi 0, %s69
      %s84 = sphi 0, %s70
      %s90 = sphi 0, %s92
      %s93 = sphi 0, %s90
      %s94 = sphi 0, %s93
      %s110 = sphi 0, %s94
    $region4: #{tpu_custom_call.1} parent=1 // loop_header_branch
      %15 = sbr.rel (%p13) target = $region8
    $region5: #{tpu_custom_call.1} parent=1 // loop_body
      %s17 = ssub.s32 %s12, 1
      %s18 = ssub.s32 %s12, 2
      %s19 = sadd.s32 %s12, 1
      %s20 = ssub.s32 %s12, %s19
      %p21 = scmp.eq.s32.totalorder %s20, 0
      %s23 = sadd.s32 %s22, 1
      %s24 = scalar_select %p21, %s22, %s23
      %p27 = pneg %p21
      %p28 = scmp.eq.s32.totalorder %s12, 1
      %p29 = por %p27, %p28
      %p30 = scmp.ne.s32.totalorder %s22, %s25
      %p31 = scmp.eq.s32.totalorder %s12, 0
      %p32 = por %p30, %p31
      %p33 = scmp.ne.s32.totalorder %s22, %s25
      %p34 = scmp.eq.s32.totalorder %s17, 1
      %p35 = por %p33, %p34
      %p36 = scmp.ne.s32.totalorder %s25, %s26
      %p37 = scmp.eq.s32.totalorder %s17, 0
      %p38 = por %p36, %p37
      %p39 = scmp.ne.s32.totalorder %s25, %s26
      %p40 = scmp.eq.s32.totalorder %s18, 1
      %p41 = por %p39, %p40
      %p43 = scmp.ne.s32.totalorder %s26, %s42
      %p44 = scmp.eq.s32.totalorder %s18, 0
      %p45 = por %p43, %p44
      %s47 = sadd.s32 %s46, 1
      %p50 = scmp.eq.s32.totalorder %s12, 1
      %p51 = scmp.ne.s32.totalorder %s46, %s48
      %p52 = scmp.eq.s32.totalorder %s12, 0
      %p53 = por %p51, %p52
      %p54 = scmp.ne.s32.totalorder %s46, %s48
      %p55 = scmp.eq.s32.totalorder %s17, 1
      %p56 = por %p54, %p55
      %p57 = scmp.ne.s32.totalorder %s48, %s49
      %p58 = scmp.eq.s32.totalorder %s17, 0
      %p59 = por %p57, %p58
      %p60 = scmp.ne.s32.totalorder %s48, %s49
      %p61 = scmp.eq.s32.totalorder %s18, 1
      %p62 = por %p60, %p61
      %p64 = scmp.ne.s32.totalorder %s49, %s63
      %p65 = scmp.eq.s32.totalorder %s18, 0
      %p66 = por %p64, %p65
      %s68 = sadd.s32 %s67, 1
      %p71 = scmp.eq.s32.totalorder %s12, 1
      %p72 = scmp.ne.s32.totalorder %s67, %s69
      %p73 = scmp.eq.s32.totalorder %s12, 0
      %p74 = por %p72, %p73
      %p75 = scmp.ne.s32.totalorder %s67, %s69
      %p76 = scmp.eq.s32.totalorder %s17, 1
      %p77 = por %p75, %p76
      %p78 = scmp.ne.s32.totalorder %s69, %s70
      %p79 = scmp.eq.s32.totalorder %s17, 0
      %p80 = por %p78, %p79
      %p81 = scmp.ne.s32.totalorder %s69, %s70
      %p82 = scmp.eq.s32.totalorder %s18, 1
      %p83 = por %p81, %p82
      %p85 = scmp.ne.s32.totalorder %s70, %s84
      %p86 = scmp.eq.s32.totalorder %s18, 0
      %p87 = por %p85, %p86
      %s88 = ssub.s32 %s12, %s19
      %p89 = scmp.eq.s32.totalorder %s88, 0
      %s91 = sadd.s32 %s90, 1
      %s92 = scalar_select %p89, %s90, %s91
      %p95 = pneg %p89
      %p96 = scmp.eq.s32.totalorder %s12, 1
      %p97 = por %p95, %p96
      %p98 = scmp.ne.s32.totalorder %s90, %s93
      %p99 = scmp.eq.s32.totalorder %s12, 0
      %p100 = por %p98, %p99
      %p101 = scmp.ne.s32.totalorder %s90, %s93
      %p102 = scmp.eq.s32.totalorder %s17, 1
      %p103 = por %p101, %p102
      %p104 = scmp.ne.s32.totalorder %s93, %s94
      %p105 = scmp.eq.s32.totalorder %s17, 0
      %p106 = por %p104, %p105
      %p107 = scmp.ne.s32.totalorder %s93, %s94
      %p108 = scmp.eq.s32.totalorder %s18, 1
      %p109 = por %p107, %p108
      %p111 = scmp.ne.s32.totalorder %s94, %s110
      %p112 = scmp.eq.s32.totalorder %s18, 0
      %p113 = por %p111, %p112
      %p114 = scmp.le.s32.totalorder 1, %s12
      %p115 = scmp.lt.s32.totalorder %s12, 3
      %p116 = pnand %p114, %p115
      %p117 = pneg %p116
      // Predicated region
      $region9: #{tpu_custom_call.1} parent=5 // pred_check
        _
      $region10: #{tpu_custom_call.1} parent=5 // pred_check_branch
        %119 = sbr.rel (%p116) target = $region12
      $region11: #{tpu_custom_call.1} parent=5 // pred_region
        %s120 = ssub.s32 %s12, 1
        // Predicated region
        $region13: #{tpu_custom_call.1} parent=11 // pred_check
          %p121 = pneg %p59
        $region14: #{tpu_custom_call.1} parent=11 // pred_check_branch
          %123 = sbr.rel (%p121) target = $region16
        $region15: #{tpu_custom_call.1} parent=11 // pred_region
          _
        $region16: #{tpu_custom_call.1} parent=11 // pred_fallthru
          _
        // Predicated region
        $region17: #{tpu_custom_call.1} parent=11 // pred_check
          %p124 = pneg %p80
        $region18: #{tpu_custom_call.1} parent=11 // pred_check_branch
          %126 = sbr.rel (%p124) target = $region20
        $region19: #{tpu_custom_call.1} parent=11 // pred_region
          _
        $region20: #{tpu_custom_call.1} parent=11 // pred_fallthru
          _
      $region12: #{tpu_custom_call.1} parent=5 // pred_fallthru
        _
      %p127 = scmp.lt.s32.totalorder %s12, 2
      // Predicated region
      $region21: #{tpu_custom_call.1} parent=5 // pred_check
        %p128 = pneg %p127
      $region22: #{tpu_custom_call.1} parent=5 // pred_check_branch
        %130 = sbr.rel (%p128) target = $region24
      $region23: #{tpu_custom_call.1} parent=5 // pred_region
        // Predicated region
        $region25: #{tpu_custom_call.1} parent=23 // pred_check
          %p131 = pneg %p32
        $region26: #{tpu_custom_call.1} parent=23 // pred_check_branch
          %133 = sbr.rel (%p131) target = $region28
        $region27: #{tpu_custom_call.1} parent=23 // pred_region
          %p134 = scmp.lt.s32.totalorder %s12, 1
          %s135 = scalar_select %p134, %s12, 1
          %s136 = smul.addr %s135, 10
          %s137 = smul.addr %s136, 4
          %s138 = scalar_lea.vmem %s0, %s137
        $region28: #{tpu_custom_call.1} parent=23 // pred_fallthru
          _
      $region24: #{tpu_custom_call.1} parent=5 // pred_fallthru
        _
      %p139 = scmp.le.s32.totalorder 1, %s12
      %p140 = scmp.lt.s32.totalorder %s12, 3
      %p141 = pnand %p139, %p140
      %p142 = pneg %p141
      // Predicated region
      $region29: #{tpu_custom_call.1} parent=5 // pred_check
        _
      $region30: #{tpu_custom_call.1} parent=5 // pred_check_branch
        %144 = sbr.rel (%p141) target = $region32
      $region31: #{tpu_custom_call.1} parent=5 // pred_region
        %s145 = ssub.s32 %s12, 1
        %p146 = scmp.lt.s32.totalorder %s17, 1
        %s147 = scalar_select %p146, %s17, 1
        %s148 = smul.addr %s147, 10
        %s149 = smul.addr %s148, 4
        %s150 = scalar_lea.vmem %s0, %s149
        %p151 = pneg %p38
        %p152 = pneg %p35
        %p153 = pneg %p59
        %p154 = pneg %p56
        %p155 = pneg %p80
        %p156 = pneg %p77
        %p157 = pneg %p106
        %p158 = pneg %p103
        %s159 = sand.u32 %s93, 1
        %s160 = scalar_lea.sflag [#allocation3], %s159
        %s161 = sand.u32 %s93, 1
        %s162 = smul.addr %s161, 16
        %s163 = scalar_lea.vmem [#allocation2], %s162
        %p164 = scmp.lt.s32.totalorder %s17, 1
        %s165 = scalar_select %p164, %s17, 1
        %s166 = smul.addr %s165, 10
        %s167 = smul.addr %s166, 4
        %s168 = scalar_lea.vmem %s0, %s167
        %v170 = vld [vmem:[%s1] sm:$0xf]
        %v171 = vld [vmem:[%s168] sm:$0xff]
        %v172 = vld [vmem:[%s168 + $0x8] sm:$0xff]
        %v173 = vld [vmem:[%s168 + $0x10] sm:$0xff]
        %v174 = vld [vmem:[%s168 + $0x18] sm:$0xff]
        %v175 = vld [vmem:[%s168 + $0x20] sm:$0x33]
        %v176 = vld [vmem:[%s2] sm:$0xff]
        %178 = vset.pattern.permute.xlu0 0
        %179 = vperm.xlu0 %178, %v176
        %v180 = vpop.permute.xlu0 %179
        %v187 = vunpack.c.l.b16 %v171
        %v188 = vunpack.c.h.b16 %v171
        %v189 = vunpack.c.l.b16 %v172
        %v190 = vunpack.c.h.b16 %v172
        %v191 = vunpack.c.l.b16 %v173
        %v192 = vunpack.c.h.b16 %v173
        %v193 = vunpack.c.l.b16 %v174
        %v194 = vunpack.c.h.b16 %v174
        %v195 = vunpack.c.l.b16 %v175
        %v196 = vunpack.c.h.b16 %v175
        %v197 = vpack.c.b16 %v189, %v187
        %v198 = vpack.c.b16 %v190, %v188
        %v199 = vpack.c.b16 %v193, %v191
        %v200 = vpack.c.b16 %v194, %v192
        %v201 = vpack.c.b16 %v195, %v195
        %v202 = vpack.c.b16 %v196, %v196
        %vm207 = vcmask 293888
        %v209 = vsel %vm207, %v170, 0
        %vm211 = vcmask 1041408
        %v213 = vsel %vm211, %v201, 0
        %v216 = vsel %vm211, %v202, 0
        %218 = vmatprep.subr.bf16.mxu0 %v198
        %219 = vmatpush1.bf16.msra.mxu0 %v197
        %220 = vmatprep.subr.bf16.mxu0 %v200
        %221 = vmatpush1.bf16.msra.mxu0 %v199
        %222 = vmatprep.subr.bf16.mxu0 %v216
        %223 = vmatpush1.bf16.msra.mxu0 %v213
        %224 = vmatprep.subr.bf16.mxu0 0
        %225 = vmatpush1.bf16.msra.mxu0 0
        %226 = vmatprep.subr.bf16.mxu0 0
        %227 = vmatpush1.bf16.msra.mxu0 0
        %228 = vmatprep.subr.bf16.mxu0 0
        %229 = vmatpush1.bf16.msra.mxu0 0
        %230 = vmatprep.subr.bf16.mxu0 0
        %231 = vmatpush1.bf16.msra.mxu0 0
        %232 = vmatprep.subr.bf16.mxu0 0
        %233 = vmatpush1.bf16.msra.mxu0 0
        %234 = vmatprep.subr.bf16.mxu0 0
        %235 = vmatpush1.bf16.msra.mxu0 0
        %236 = vmatprep.subr.bf16.mxu0 0
        %237 = vmatpush1.bf16.msra.mxu0 0
        %238 = vmatprep.subr.bf16.mxu0 0
        %239 = vmatpush1.bf16.msra.mxu0 0
        %240 = vmatprep.subr.bf16.mxu0 0
        %241 = vmatpush1.bf16.msra.mxu0 0
        %242 = vmatprep.subr.bf16.mxu0 0
        %243 = vmatpush1.bf16.msra.mxu0 0
        %244 = vmatprep.subr.bf16.mxu0 0
        %245 = vmatpush1.bf16.msra.mxu0 0
        %246 = vmatprep.subr.bf16.mxu0 0
        %247 = vmatpush1.bf16.msra.mxu0 0
        %248 = vmatprep.subr.bf16.mxu0 0
        %249 = vmatpush1.bf16.msra.mxu0 0
        %250 = vmatprep.mubr.bf16.mxu0 0
        %251 = vmatmul.mubr.bf16.gmra.mrb[0].mxu0 %v209
        %v252 = vpop.f32.mrb[0].mxu0
        %v253 = vadd.f32 %v180, %v252
        %v254 = vpop.f32.mrb[0].mxu0
        %v255 = vadd.f32 %v180, %v254
        %v256 = vpop.f32.mrb[0].mxu0
        %v257 = vpop.f32.mrb[0].mxu0
        %258 = vdwg.mxu0
        %v259 = vtanh.pop %v253
        %v260 = vtanh.pop %v255
        %261 = vst [vmem:[%s163] sm:$0xff] %v259
        %262 = vst [vmem:[%s163 + $0x8] sm:$0xff] %v260
        %s263 = sand.u32 %s93, 1
        %s264 = scalar_lea.sflag [#allocation3], %s263
        %s265 = sand.u32 %s93, 1
        %s266 = smul.addr %s265, 16
        %s267 = scalar_lea.vmem [#allocation2], %s266
        // Predicated region
        $region33: #{tpu_custom_call.1} parent=31 // pred_check
          %p268 = pneg %p103
        $region34: #{tpu_custom_call.1} parent=31 // pred_check_branch
          %270 = sbr.rel (%p268) target = $region36
        $region35: #{tpu_custom_call.1} parent=31 // pred_region
          %s272 = ssub.s32 256, 256
          %273 = vsyncadd %s264, %s272
          %s274 = smul.addr %s17, 2
          %s275 = smul.addr %s274, 128
          %s276 = scalar_lea.hbm %s3, %s275
          %s278 = sshll.u32 %s267, 4
          %s279 = int_to_ptr.vmem [resolvable:$true] %s278
          %281 = dma.vmem_to_hbm [thread:$0]  %s279, 256, %s276, %s264
        $region36: #{tpu_custom_call.1} parent=31 // pred_fallthru
          _
      $region32: #{tpu_custom_call.1} parent=5 // pred_fallthru
        _
      %p282 = scmp.le.s32.totalorder 2, %s12
      // Predicated region
      $region37: #{tpu_custom_call.1} parent=5 // pred_check
        %p283 = pneg %p282
      $region38: #{tpu_custom_call.1} parent=5 // pred_check_branch
        %285 = sbr.rel (%p283) target = $region40
      $region39: #{tpu_custom_call.1} parent=5 // pred_region
        %s286 = ssub.s32 %s12, 2
        // Predicated region
        $region41: #{tpu_custom_call.1} parent=39 // pred_check
          %p287 = pneg %p109
        $region42: #{tpu_custom_call.1} parent=39 // pred_check_branch
          %289 = sbr.rel (%p287) target = $region44
        $region43: #{tpu_custom_call.1} parent=39 // pred_region
          %s290 = sand.u32 %s94, 1
          %s291 = scalar_lea.sflag [#allocation3], %s290
          %s292 = sand.u32 %s94, 1
          %s293 = smul.addr %s292, 16
          %s294 = scalar_lea.vmem [#allocation2], %s293
          %295 = dma.done %s291, 256
        $region44: #{tpu_custom_call.1} parent=39 // pred_fallthru
          _
      $region40: #{tpu_custom_call.1} parent=5 // pred_fallthru
        _
    $region6: #{tpu_custom_call.1} parent=1 // loop_footer
      %s16 = sadd.s32 1, %s12
    $region7: #{tpu_custom_call.1} parent=1 // loop_footer_branch
      %11 = sbr.rel target = $region3
    $region8: #{tpu_custom_call.1} parent=1 // loop_exit
      _
    %296 = vsyncpa [#allocation3], 1
    %s297 = scalar_lea.sflag [#allocation3], 1
    %298 = vsyncpa %s297, 1

</llo_original>
